<compile_context>
chip_gen: v7x
topology: tpu7x:2x2x1
jax: 0.10.0
libtpu: 0.0.40
codegen_flags: <defaults>
</compile_context>

<pallas_src>
from functools import partial

import jax
import jax.numpy as jnp
from jax import lax
from jax.experimental import pallas as pl
from jax.experimental.pallas import tpu as pltpu


_SMALL_K_UNROLL = 8   # at/below this K (and small tm, f32) use the VPU rank-1 path
_MXU_MIN_TM = 128     # row-tile size at/above which the MXU path wins even for tiny K

# Tile caps: worst-case double-buffered f32 working set
#   2*(tm*tk + tk*tn + tn)*4 + 2*tm*tn*4 + tm*tn*4  ~= 12.5 MiB,
# comfortably inside the 32 MiB scoped VMEM of every generation (incl. v7x).
_MAX_TM = 512
_MAX_TN = 1024
_MAX_TK = 512


def _round_up(x, m):
    return ((x + m - 1) // m) * m


def _plan_rows(M, max_tm=_MAX_TM):
    """M-tile plan: at least two parallel M blocks once M spans more than one
    sublane tile (v7x has 2 TensorCores), never a silent full-extent fallback.
    Returns (tm, padded_M); caller zero-pads rows up to padded_M."""
    if M <= 8:
        return M, M
    tm = min(max_tm, _round_up(pl.cdiv(M, 2), 8))
    return tm, _round_up(M, tm)


def _plan_cols(dim, max_tile, align=128):
    """Lane-dim tile plan: single full-extent block while it fits, else a
    128-aligned tile with the dim zero-padded to a multiple of it."""
    if dim <= max_tile:
        return dim, dim
    tile = max(align, (max_tile // align) * align)
    return tile, _round_up(dim, tile)


def _patch_embed_kernel(p_ref, w_ref, b_ref, o_ref, acc_ref, *, use_mxu):
    # p_ref: (tm, tk) patch tile; w_ref: (tk, tn); b_ref: (1, tn)
    # o_ref: (tm, tn); acc_ref: (tm, tn) f32 scratch persistent across the k axis.
    k_idx = pl.program_id(2)

    @pl.when(k_idx == 0)
    def _init():
        # Fold the bias into the accumulator init so it is added exactly once
        # even when K is split across the reduction grid axis.
        acc_ref[...] = jnp.broadcast_to(
            b_ref[...].astype(jnp.float32), acc_ref.shape
        )

    if use_mxu:
        # MXU path (separate VLIW "vector extended" slot): compute hides under
        # the output-write DMA.  bf16 operands are fed natively.
        acc_ref[...] += jnp.dot(
            p_ref[...], w_ref[...], preferred_element_type=jnp.float32
        )
    else:
        # Tiny-K, small-tile path: K unrolled rank-1 broadcast-FMA updates on
        # the VPU (skips MXU relayout / result-FIFO latency for K of a few).
        # Casts hoisted out of the unrolled loop (v5e note in the review).
        # TODO(synk): re-benchmark this heuristic on v7x, whose faster HBM can
        # make the VPU path VALU/XLU-bound; prefer MXU there if vmul/vadd bind.
        p = p_ref[...].astype(jnp.float32)
        w = w_ref[...].astype(jnp.float32)
        acc = acc_ref[...]
        for k in range(p.shape[1]):
            acc = acc + p[:, k:k + 1] * w[k:k + 1, :]
        acc_ref[...] = acc

    @pl.when(k_idx == pl.num_programs(2) - 1)
    def _finalize():
        o_ref[...] = acc_ref[...].astype(o_ref.dtype)


def patch_embed_forward(x, conv_w, conv_b, patch_size):
    """x: (B, C, H, W) NCHW; conv_w: (E, C, ph, pw); conv_b: (E,)."""
    B, C, H, W = x.shape
    ph, pw = patch_size
    E = conv_w.shape[0]
    gh, gw = H // ph, W // pw
    num_patches = gh * gw
    K = C * ph * pw
    M = B * num_patches

    # Patch extraction (B,C,H,W) -> (M, K); flagged fusible into the first
    # pallas_call operand (allow_input_fusion) so XLA can avoid writing the
    # patch matrix to HBM.
    # TODO(synk): verify in the HLO dump that the 6-D transpose really fuses
    # into the Mosaic custom call; if not, at real image sizes move extraction
    # in-kernel (grid over (B, gh) row-bands) -- it is the dominant HBM traffic.
    patches = (
        x.reshape(B, C, gh, ph, gw, pw)
        .transpose(0, 2, 4, 1, 3, 5)            # (B, gh, gw, C, ph, pw)
        .reshape(M, K)
    )
    # Conv weight (E, C, ph, pw) -> (K, E); contraction order matches the conv.
    w_mat = conv_w.reshape(E, K).T
    b_mat = conv_b.reshape(1, E)

    tm, M_pad = _plan_rows(M)
    tk, K_pad = _plan_cols(K, _MAX_TK)
    tn, E_pad = _plan_cols(E, _MAX_TN)
    grid = (M_pad // tm, E_pad // tn, K_pad // tk)

    # Zero-pad to the tile grid (no silent full-extent fallback); padded K rows
    # of the weight are zero so they contribute nothing.
    if M_pad != M:
        patches = jnp.pad(patches, ((0, M_pad - M), (0, 0)))
    if K_pad != K:
        patches = jnp.pad(patches, ((0, 0), (0, K_pad - K)))
        w_mat = jnp.pad(w_mat, ((0, K_pad - K), (0, 0)))
    if E_pad != E:
        w_mat = jnp.pad(w_mat, ((0, 0), (0, E_pad - E)))
        b_mat = jnp.pad(b_mat, ((0, 0), (0, E_pad - E)))

    # MXU whenever the row tile amortizes it, K is non-trivial, or inputs are
    # not f32 (v5e's VPU/EUP have no bf16); VPU rank-1 path otherwise.
    use_mxu = (
        (tm >= _MXU_MIN_TM)
        or (K_pad > _SMALL_K_UNROLL)
        or (x.dtype != jnp.float32)
    )

    itemsize = jnp.dtype(x.dtype).itemsize
    # Advisory cost so XLA schedules this (fixed-overhead-bound at toy sizes)
    # custom call sensibly; at the default shape a plain XLA dot would match.
    cost = pl.CostEstimate(
        flops=2 * M * K * E + M * E,
        transcendentals=0,
        bytes_accessed=(M * K + K * E + E) * itemsize + M * E * itemsize,
    )

    out = pl.pallas_call(
        partial(_patch_embed_kernel, use_mxu=use_mxu),
        out_shape=jax.ShapeDtypeStruct((M_pad, E_pad), x.dtype),
        grid_spec=pltpu.PrefetchScalarGridSpec(
            num_scalar_prefetch=0,
            grid=grid,
            in_specs=[
                pl.BlockSpec((tm, tk), lambda i, j, k: (i, k)),
                pl.BlockSpec((tk, tn), lambda i, j, k: (k, j)),
                pl.BlockSpec((1, tn), lambda i, j, k: (0, j)),
            ],
            out_specs=pl.BlockSpec((tm, tn), lambda i, j, k: (i, j)),
            scratch_shapes=[pltpu.VMEM((tm, tn), jnp.float32)],
        ),
        compiler_params=pltpu.CompilerParams(
            dimension_semantics=("parallel", "parallel", "arbitrary"),
            # Tile caps above bound the double-buffered working set to ~12 MiB;
            # explicit limit keeps v7x (32 MiB scoped / 64 MiB physical) safe.
            vmem_limit_bytes=32 * 1024 * 1024,
            # Allow XLA to fuse the patch-extraction transpose into operand 0.
            allow_input_fusion=[True, False, False],
        ),
        cost_estimate=cost,
    )(patches, w_mat, b_mat)

    out = out[:M, :E]
    return out.reshape(B, num_patches, E)


def _reference_forward(x, conv_w, conv_b, patch_size):
    # Pure-JAX reference: strided conv (NCHW / OIHW), flatten(2), transpose(1,2).
    y = lax.conv_general_dilated(
        x, conv_w,
        window_strides=patch_size,
        padding="VALID",
        dimension_numbers=("NCHW", "OIHW", "NCHW"),
    )
    y = y + conv_b.reshape(1, -1, 1, 1)
    B, E, Hp, Wp = y.shape
    return y.reshape(B, E, Hp * Wp).transpose(0, 2, 1)


if __name__ == "__main__":
    # Module defaults: img_size=40 -> (8, 40), patch=(2, 2), in_chans=1, embed_dim=192
    img_size = (40 // 5, 40)          # (H, W) = (8, 40)
    patch_size = (2, 2)
    in_chans = 1
    embed_dim = 192
    batch = 2
    num_patches = (img_size[1] // patch_size[1]) * (img_size[0] // patch_size[0])  # 80

    key = jax.random.PRNGKey(0)
    kx, kw, kb = jax.random.split(key, 3)

    x = jax.random.normal(kx, (batch, in_chans, img_size[0], img_size[1]), jnp.float32)
    conv_w = jax.random.normal(
        kw, (embed_dim, in_chans, patch_size[0], patch_size[1]), jnp.float32
    ) * 0.02
    conv_b = jax.random.normal(kb, (embed_dim,), jnp.float32) * 0.02

    out = patch_embed_forward(x, conv_w, conv_b, patch_size)
    out = jax.block_until_ready(out)

    assert out.shape == (batch, num_patches, embed_dim), out.shape

    ref = jax.block_until_ready(_reference_forward(x, conv_w, conv_b, patch_size))
    assert jnp.allclose(out, ref, atol=1e-5, rtol=1e-5), "mismatch vs reference conv"

    print("KERNEL_OK")
</pallas_src>

<mosaic_0001>
module attributes {stable_mosaic.version = 11 : i64} {
  func.func @_patch_embed_kernel(%arg0: i32, %arg1: i32, %arg2: i32, %arg3: memref<80x4xf32, #tpu.memory_space<vmem>>, %arg4: memref<4x192xf32, #tpu.memory_space<vmem>>, %arg5: memref<1x192xf32, #tpu.memory_space<vmem>>, %arg6: memref<80x192xf32, #tpu.memory_space<vmem>>, %arg7: memref<80x192xf32, #tpu.memory_space<vmem>>) attributes {dimension_semantics = [#tpu.dimension_semantics<parallel>, #tpu.dimension_semantics<parallel>, #tpu.dimension_semantics<arbitrary>], iteration_bounds = array<i64: 2, 1, 1>, scalar_prefetch = 0 : i64, scratch_operands = 1 : i64, tpu.core_type = #tpu.core_type<tc>, window_params = [{transform_indices = @transform_0, window_bounds = array<i64: 80, 4>}, {transform_indices = @transform_1, window_bounds = array<i64: 4, 192>}, {transform_indices = @transform_2, window_bounds = array<i64: 1, 192>}, {transform_indices = @transform_3, window_bounds = array<i64: 80, 192>}]} {
    %c0_i32 = arith.constant 0 : i32
    %0 = arith.cmpi eq, %arg2, %c0_i32 : i32
    %1 = arith.extui %0 : i1 to i32
    %c0_i32_0 = arith.constant 0 : i32
    %2 = arith.cmpi ne, %1, %c0_i32_0 : i32
    scf.if %2 {
      %c0_10 = arith.constant 0 : index
      %c0_11 = arith.constant 0 : index
      %34 = vector.load %arg5[%c0_10, %c0_11] : memref<1x192xf32, #tpu.memory_space<vmem>>, vector<1x192xf32>
      %35 = vector.shape_cast %34 : vector<1x192xf32> to vector<1x192xf32>
      %36 = vector.broadcast %35 : vector<1x192xf32> to vector<80x192xf32>
      %c0_12 = arith.constant 0 : index
      %c0_13 = arith.constant 0 : index
      %37 = vector.load %arg7[%c0_12, %c0_13] : memref<80x192xf32, #tpu.memory_space<vmem>>, vector<80x192xf32>
      tpu.vector_store %arg7[%c0_12, %c0_13], %36 {strides = array<i32>} : memref<80x192xf32, #tpu.memory_space<vmem>>, vector<80x192xf32>,
    } else {
    }
    %c0 = arith.constant 0 : index
    %c0_1 = arith.constant 0 : index
    %3 = vector.load %arg3[%c0, %c0_1] : memref<80x4xf32, #tpu.memory_space<vmem>>, vector<80x4xf32>
    %c0_2 = arith.constant 0 : index
    %c0_3 = arith.constant 0 : index
    %4 = vector.load %arg4[%c0_2, %c0_3] : memref<4x192xf32, #tpu.memory_space<vmem>>, vector<4x192xf32>
    %c0_4 = arith.constant 0 : index
    %c0_5 = arith.constant 0 : index
    %5 = vector.load %arg7[%c0_4, %c0_5] : memref<80x192xf32, #tpu.memory_space<vmem>>, vector<80x192xf32>
    %6 = vector.extract_strided_slice %3 {offsets = [0, 0], sizes = [80, 1], strides = [1, 1]} : vector<80x4xf32> to vector<80x1xf32>
    %7 = vector.extract_strided_slice %4 {offsets = [0, 0], sizes = [1, 192], strides = [1, 1]} : vector<4x192xf32> to vector<1x192xf32>
    %8 = vector.broadcast %6 : vector<80x1xf32> to vector<80x192xf32>
    %9 = vector.broadcast %7 : vector<1x192xf32> to vector<80x192xf32>
    %10 = arith.mulf %8, %9 : vector<80x192xf32>
    %11 = arith.addf %5, %10 : vector<80x192xf32>
    %12 = vector.extract_strided_slice %3 {offsets = [0, 1], sizes = [80, 1], strides = [1, 1]} : vector<80x4xf32> to vector<80x1xf32>
    %13 = vector.extract_strided_slice %4 {offsets = [1, 0], sizes = [1, 192], strides = [1, 1]} : vector<4x192xf32> to vector<1x192xf32>
    %14 = vector.broadcast %12 : vector<80x1xf32> to vector<80x192xf32>
    %15 = vector.broadcast %13 : vector<1x192xf32> to vector<80x192xf32>
    %16 = arith.mulf %14, %15 : vector<80x192xf32>
    %17 = arith.addf %11, %16 : vector<80x192xf32>
    %18 = vector.extract_strided_slice %3 {offsets = [0, 2], sizes = [80, 1], strides = [1, 1]} : vector<80x4xf32> to vector<80x1xf32>
    %19 = vector.extract_strided_slice %4 {offsets = [2, 0], sizes = [1, 192], strides = [1, 1]} : vector<4x192xf32> to vector<1x192xf32>
    %20 = vector.broadcast %18 : vector<80x1xf32> to vector<80x192xf32>
    %21 = vector.broadcast %19 : vector<1x192xf32> to vector<80x192xf32>
    %22 = arith.mulf %20, %21 : vector<80x192xf32>
    %23 = arith.addf %17, %22 : vector<80x192xf32>
    %24 = vector.extract_strided_slice %3 {offsets = [0, 3], sizes = [80, 1], strides = [1, 1]} : vector<80x4xf32> to vector<80x1xf32>
    %25 = vector.extract_strided_slice %4 {offsets = [3, 0], sizes = [1, 192], strides = [1, 1]} : vector<4x192xf32> to vector<1x192xf32>
    %26 = vector.broadcast %24 : vector<80x1xf32> to vector<80x192xf32>
    %27 = vector.broadcast %25 : vector<1x192xf32> to vector<80x192xf32>
    %28 = arith.mulf %26, %27 : vector<80x192xf32>
    %29 = arith.addf %23, %28 : vector<80x192xf32>
    %c0_6 = arith.constant 0 : index
    %c0_7 = arith.constant 0 : index
    %30 = vector.load %arg7[%c0_6, %c0_7] : memref<80x192xf32, #tpu.memory_space<vmem>>, vector<80x192xf32>
    tpu.vector_store %arg7[%c0_6, %c0_7], %29 {strides = array<i32>} : memref<80x192xf32, #tpu.memory_space<vmem>>, vector<80x192xf32>,
    %c0_i32_8 = arith.constant 0 : i32
    %31 = arith.cmpi eq, %arg2, %c0_i32_8 : i32
    %32 = arith.extui %31 : i1 to i32
    %c0_i32_9 = arith.constant 0 : i32
    %33 = arith.cmpi ne, %32, %c0_i32_9 : i32
    scf.if %33 {
      %c0_10 = arith.constant 0 : index
      %c0_11 = arith.constant 0 : index
      %34 = vector.load %arg7[%c0_10, %c0_11] : memref<80x192xf32, #tpu.memory_space<vmem>>, vector<80x192xf32>
      %c0_12 = arith.constant 0 : index
      %c0_13 = arith.constant 0 : index
      %35 = vector.load %arg6[%c0_12, %c0_13] : memref<80x192xf32, #tpu.memory_space<vmem>>, vector<80x192xf32>
      tpu.vector_store %arg6[%c0_12, %c0_13], %34 {strides = array<i32>} : memref<80x192xf32, #tpu.memory_space<vmem>>, vector<80x192xf32>,
    } else {
    }
    return
  }
  func.func @transform_0(%arg0: i32, %arg1: i32, %arg2: i32) -> (i32, i32) {
    %c0_i32 = arith.constant 0 : i32
    return %arg0, %arg2 : i32, i32
  }
  func.func @transform_1(%arg0: i32, %arg1: i32, %arg2: i32) -> (i32, i32) {
    %c0_i32 = arith.constant 0 : i32
    return %arg2, %arg1 : i32, i32
  }
  func.func @transform_2(%arg0: i32, %arg1: i32, %arg2: i32) -> (i32, i32) {
    %c0_i32 = arith.constant 0 : i32
    %c0_i32_0 = arith.constant 0 : i32
    return %c0_i32, %arg1 : i32, i32
  }
  func.func @transform_3(%arg0: i32, %arg1: i32, %arg2: i32) -> (i32, i32) {
    %c0_i32 = arith.constant 0 : i32
    return %arg0, %arg1 : i32, i32
  }
}

</mosaic_0001>

<llo_original>
// kernel: tpu_custom_call.1
$region0: #{tpu_custom_call.1}
  #allocation0 [shape = 'u32[]', space=smem, size = 0x4, offset = 0x4, fixed_abs, tag = 'smem constant byte address 0x4 - core index']
  #allocation1 [shape = 'u32[144,128]{1,0:T(1,128)}', space=vmem, size = 0x12000, scoped, tag = 'internal scratch']
  #allocation2 [shape = 'f32[80,192]{1,0:T(8,128)}', space=vmem, size = 0x14000, scoped, tag = 'scratch operand']
  %s0 = inlined_call_operand.vmem [shape: f32[160,4], index: 0, kind: input, shape index: {}]
  %s1 = inlined_call_operand.vmem [shape: f32[4,192], index: 1, kind: input, shape index: {}]
  %s2 = inlined_call_operand.vmem [shape: f32[1,192], index: 2, kind: input, shape index: {}]
  %s3 = inlined_call_operand.hbm [shape: f32[160,192], index: 3, kind: output, shape index: {}]
  %s4 = sld [smem:[#allocation0]]
  $region53: #{tpu_custom_call.1} parent=0
    _
  %s6 = ssub.s32 1, %s4
  %s7 = scalar_select 0, %s6, %s4
  $region1: #{tpu_custom_call.1} parent=0
    #allocation3 [shape = 'u8[163840]{0}', space=vmem, size = 0x28000, scoped, tag = 'output window, operand 0']
    #allocation4 [shape = 's32[2]{0}', space=sflag, size = 0x8, scoped, tag = 'scoped memory for tpu_custom_call.1']
    %8 = vsyncpa [#allocation4], 0
    %s9 = scalar_lea.sflag [#allocation4], 1
    %10 = vsyncpa %s9, 0
    loop: start=0, step=1, limit=4
    $region2: #{tpu_custom_call.1} parent=1 // loop_pre_header
      _
    $region3: #{tpu_custom_call.1} parent=1 // loop_header
      %s12 = sphi 0, %s16
      %p13 = scmp.ge.s32.totalorder %s12, 4
      %s19 = sphi 0, %s38
      %s20 = sphi 0, %s34
      %s21 = sphi 0, %s30
      %s22 = sphi 0, %s19
      %s23 = sphi 0, %s20
      %s24 = sphi 0, %s21
      %s25 = sphi 0, %s22
      %s26 = sphi 0, %s23
      %s27 = sphi 0, %s24
      %s43 = sphi 0, %s45
      %s46 = sphi 0, %s43
      %s47 = sphi 0, %s46
      %s63 = sphi 0, %s47
      %s71 = sphi 0, %s73
      %s74 = sphi 0, %s71
      %s75 = sphi 0, %s74
      %s91 = sphi 0, %s75
      %s97 = sphi 0, %s99
      %s100 = sphi 0, %s97
      %s101 = sphi 0, %s100
      %s117 = sphi 0, %s101
      %s125 = sphi 0, %s127
      %s128 = sphi 0, %s125
      %s129 = sphi 0, %s128
      %s145 = sphi 0, %s129
    $region4: #{tpu_custom_call.1} parent=1 // loop_header_branch
      %15 = sbr.rel (%p13) target = $region8
    $region5: #{tpu_custom_call.1} parent=1 // loop_body
      %s17 = ssub.s32 %s12, 1
      %s18 = ssub.s32 %s12, 2
      %s28 = sadd.s32 1, %s21
      %p29 = scmp.ge.s32.totalorder %s28, 1
      %s30 = scalar_select %p29, 0, %s28
      %s31 = sadd.s32 1, %s20
      %s32 = scalar_select %p29, %s31, %s20
      %p33 = scmp.ge.s32.totalorder %s32, 1
      %s34 = scalar_select %p33, 0, %s32
      %s35 = sadd.s32 1, %s19
      %s36 = scalar_select %p33, %s35, %s19
      %p37 = scmp.ge.s32.totalorder %s36, 2
      %s38 = scalar_select %p37, 0, %s36
      %s39 = ssub.s32 %s19, %s38
      %s40 = ssub.s32 %s21, %s30
      %s41 = sor.u32 %s39, %s40
      %p42 = scmp.eq.s32.totalorder %s41, 0
      %s44 = sadd.s32 %s43, 1
      %s45 = scalar_select %p42, %s43, %s44
      %p48 = pneg %p42
      %p49 = scmp.eq.s32.totalorder %s12, 1
      %p50 = por %p48, %p49
      %p51 = scmp.ne.s32.totalorder %s43, %s46
      %p52 = scmp.eq.s32.totalorder %s12, 0
      %p53 = por %p51, %p52
      %p54 = scmp.ne.s32.totalorder %s43, %s46
      %p55 = scmp.eq.s32.totalorder %s17, 1
      %p56 = por %p54, %p55
      %p57 = scmp.ne.s32.totalorder %s46, %s47
      %p58 = scmp.eq.s32.totalorder %s17, 0
      %p59 = por %p57, %p58
      %p60 = scmp.ne.s32.totalorder %s46, %s47
      %p61 = scmp.eq.s32.totalorder %s18, 1
      %p62 = por %p60, %p61
      %p64 = scmp.ne.s32.totalorder %s47, %s63
      %p65 = scmp.eq.s32.totalorder %s18, 0
      %p66 = por %p64, %p65
      %s67 = ssub.s32 %s21, %s30
      %s68 = ssub.s32 %s20, %s34
      %s69 = sor.u32 %s67, %s68
      %p70 = scmp.eq.s32.totalorder %s69, 0
      %s72 = sadd.s32 %s71, 1
      %s73 = scalar_select %p70, %s71, %s72
      %p76 = pneg %p70
      %p77 = scmp.eq.s32.totalorder %s12, 1
      %p78 = por %p76, %p77
      %p79 = scmp.ne.s32.totalorder %s71, %s74
      %p80 = scmp.eq.s32.totalorder %s12, 0
      %p81 = por %p79, %p80
      %p82 = scmp.ne.s32.totalorder %s71, %s74
      %p83 = scmp.eq.s32.totalorder %s17, 1
      %p84 = por %p82, %p83
      %p85 = scmp.ne.s32.totalorder %s74, %s75
      %p86 = scmp.eq.s32.totalorder %s17, 0
      %p87 = por %p85, %p86
      %p88 = scmp.ne.s32.totalorder %s74, %s75
      %p89 = scmp.eq.s32.totalorder %s18, 1
      %p90 = por %p88, %p89
      %p92 = scmp.ne.s32.totalorder %s75, %s91
      %p93 = scmp.eq.s32.totalorder %s18, 0
      %p94 = por %p92, %p93
      %s95 = ssub.s32 %s20, %s34
      %p96 = scmp.eq.s32.totalorder %s95, 0
      %s98 = sadd.s32 %s97, 1
      %s99 = scalar_select %p96, %s97, %s98
      %p102 = pneg %p96
      %p103 = scmp.eq.s32.totalorder %s12, 1
      %p104 = por %p102, %p103
      %p105 = scmp.ne.s32.totalorder %s97, %s100
      %p106 = scmp.eq.s32.totalorder %s12, 0
      %p107 = por %p105, %p106
      %p108 = scmp.ne.s32.totalorder %s97, %s100
      %p109 = scmp.eq.s32.totalorder %s17, 1
      %p110 = por %p108, %p109
      %p111 = scmp.ne.s32.totalorder %s100, %s101
      %p112 = scmp.eq.s32.totalorder %s17, 0
      %p113 = por %p111, %p112
      %p114 = scmp.ne.s32.totalorder %s100, %s101
      %p115 = scmp.eq.s32.totalorder %s18, 1
      %p116 = por %p114, %p115
      %p118 = scmp.ne.s32.totalorder %s101, %s117
      %p119 = scmp.eq.s32.totalorder %s18, 0
      %p120 = por %p118, %p119
      %s121 = ssub.s32 %s19, %s38
      %s122 = ssub.s32 %s20, %s34
      %s123 = sor.u32 %s121, %s122
      %p124 = scmp.eq.s32.totalorder %s123, 0
      %s126 = sadd.s32 %s125, 1
      %s127 = scalar_select %p124, %s125, %s126
      %p130 = pneg %p124
      %p131 = scmp.eq.s32.totalorder %s12, 1
      %p132 = por %p130, %p131
      %p133 = scmp.ne.s32.totalorder %s125, %s128
      %p134 = scmp.eq.s32.totalorder %s12, 0
      %p135 = por %p133, %p134
      %p136 = scmp.ne.s32.totalorder %s125, %s128
      %p137 = scmp.eq.s32.totalorder %s17, 1
      %p138 = por %p136, %p137
      %p139 = scmp.ne.s32.totalorder %s128, %s129
      %p140 = scmp.eq.s32.totalorder %s17, 0
      %p141 = por %p139, %p140
      %p142 = scmp.ne.s32.totalorder %s128, %s129
      %p143 = scmp.eq.s32.totalorder %s18, 1
      %p144 = por %p142, %p143
      %p146 = scmp.ne.s32.totalorder %s129, %s145
      %p147 = scmp.eq.s32.totalorder %s18, 0
      %p148 = por %p146, %p147
      %p149 = scmp.le.s32.totalorder 1, %s12
      %p150 = scmp.lt.s32.totalorder %s12, 3
      %p151 = pnand %p149, %p150
      %p152 = pneg %p151
      // Predicated region
      $region9: #{tpu_custom_call.1} parent=5 // pred_check
        _
      $region10: #{tpu_custom_call.1} parent=5 // pred_check_branch
        %154 = sbr.rel (%p151) target = $region12
      $region11: #{tpu_custom_call.1} parent=5 // pred_region
        %s155 = ssub.s32 %s12, 1
        // Predicated region
        $region13: #{tpu_custom_call.1} parent=11 // pred_check
          %p156 = pneg %p87
        $region14: #{tpu_custom_call.1} parent=11 // pred_check_branch
          %158 = sbr.rel (%p156) target = $region16
        $region15: #{tpu_custom_call.1} parent=11 // pred_region
          %s159 = smul.u32 2, %s23
          %p160 = scmp.lt.s32.totalorder %s24, 0
          %s161 = scalar_select %p160, %s24, 0
          %p162 = scmp.lt.s32.totalorder %s159, 1
          %s163 = scalar_select %p162, %s159, 1
          %s164 = smul.addr %s161, 2
          %s165 = sadd.s32 %s163, %s164
          %s166 = smul.addr %s165, 4
          %s167 = scalar_lea.vmem %s1, %s166
          %s168 = smul.u32 2, %s23
        $region16: #{tpu_custom_call.1} parent=11 // pred_fallthru
          _
        // Predicated region
        $region17: #{tpu_custom_call.1} parent=11 // pred_check
          %p169 = pneg %p113
        $region18: #{tpu_custom_call.1} parent=11 // pred_check_branch
          %171 = sbr.rel (%p169) target = $region20
        $region19: #{tpu_custom_call.1} parent=11 // pred_region
          %s172 = smul.u32 2, %s23
          %p173 = scmp.lt.s32.totalorder %s172, 1
          %s174 = scalar_select %p173, %s172, 1
          %s175 = scalar_lea.vmem %s2, %s174
          %s176 = smul.u32 2, %s23
        $region20: #{tpu_custom_call.1} parent=11 // pred_fallthru
          _
      $region12: #{tpu_custom_call.1} parent=5 // pred_fallthru
        _
      %p177 = scmp.lt.s32.totalorder %s12, 2
      // Predicated region
      $region21: #{tpu_custom_call.1} parent=5 // pred_check
        %p178 = pneg %p177
      $region22: #{tpu_custom_call.1} parent=5 // pred_check_branch
        %180 = sbr.rel (%p178) target = $region24
      $region23: #{tpu_custom_call.1} parent=5 // pred_region
        // Predicated region
        $region25: #{tpu_custom_call.1} parent=23 // pred_check
          %p181 = pneg %p53
        $region26: #{tpu_custom_call.1} parent=23 // pred_check_branch
          %183 = sbr.rel (%p181) target = $region28
        $region27: #{tpu_custom_call.1} parent=23 // pred_region
          %s184 = smul.u32 10, %s19
          %p185 = scmp.lt.s32.totalorder %s184, 19
          %s186 = scalar_select %p185, %s184, 19
          %p187 = scmp.lt.s32.totalorder %s21, 0
          %s188 = scalar_select %p187, %s21, 0
          %s189 = sadd.s32 %s188, %s186
          %s190 = smul.addr %s189, 8
          %s191 = scalar_lea.vmem %s0, %s190
          %s192 = smul.u32 10, %s19
        $region28: #{tpu_custom_call.1} parent=23 // pred_fallthru
          _
      $region24: #{tpu_custom_call.1} parent=5 // pred_fallthru
        _
      %p193 = scmp.le.s32.totalorder 1, %s12
      %p194 = scmp.lt.s32.totalorder %s12, 3
      %p195 = pnand %p193, %p194
      %p196 = pneg %p195
      // Predicated region
      $region29: #{tpu_custom_call.1} parent=5 // pred_check
        _
      $region30: #{tpu_custom_call.1} parent=5 // pred_check_branch
        %198 = sbr.rel (%p195) target = $region32
      $region31: #{tpu_custom_call.1} parent=5 // pred_region
        %s199 = ssub.s32 %s12, 1
        %s200 = smul.u32 10, %s22
        %p201 = scmp.lt.s32.totalorder %s200, 19
        %s202 = scalar_select %p201, %s200, 19
        %p203 = scmp.lt.s32.totalorder %s24, 0
        %s204 = scalar_select %p203, %s24, 0
        %s205 = sadd.s32 %s204, %s202
        %s206 = smul.addr %s205, 8
        %s207 = scalar_lea.vmem %s0, %s206
        %p208 = pneg %p59
        %p209 = pneg %p56
        %s210 = smul.u32 2, %s23
        %p211 = scmp.lt.s32.totalorder %s24, 0
        %s212 = scalar_select %p211, %s24, 0
        %p213 = scmp.lt.s32.totalorder %s210, 1
        %s214 = scalar_select %p213, %s210, 1
        %s215 = smul.addr %s212, 2
        %s216 = sadd.s32 %s214, %s215
        %s217 = smul.addr %s216, 4
        %s218 = scalar_lea.vmem %s1, %s217
        %p219 = pneg %p87
        %p220 = pneg %p84
        %s221 = smul.u32 2, %s23
        %p222 = scmp.lt.s32.totalorder %s221, 1
        %s223 = scalar_select %p222, %s221, 1
        %s224 = scalar_lea.vmem %s2, %s223
        %p225 = pneg %p113
        %p226 = pneg %p110
        %p227 = pneg %p141
        %p228 = pneg %p138
        %s229 = sand.u32 %s128, 1
        %s230 = scalar_lea.sflag [#allocation4], %s229
        %s231 = sand.u32 %s128, 1
        %s232 = smul.addr %s231, 160
        %s233 = scalar_lea.vmem [#allocation3], %s232
        %s234 = smul.u32 10, %s22
        %p235 = scmp.lt.s32.totalorder %s234, 19
        %s236 = scalar_select %p235, %s234, 19
        %p237 = scmp.lt.s32.totalorder %s24, 0
        %s238 = scalar_select %p237, %s24, 0
        %s239 = sadd.s32 %s238, %s236
        %s240 = smul.addr %s239, 8
        %s241 = scalar_lea.vmem %s0, %s240
        %s242 = smul.u32 10, %s22
        %s243 = smul.u32 2, %s23
        %p244 = scmp.lt.s32.totalorder %s24, 0
        %s245 = scalar_select %p244, %s24, 0
        %p246 = scmp.lt.s32.totalorder %s243, 1
        %s247 = scalar_select %p246, %s243, 1
        %s248 = smul.addr %s245, 2
        %s249 = sadd.s32 %s247, %s248
        %s250 = smul.addr %s249, 4
        %s251 = scalar_lea.vmem %s1, %s250
        %s252 = smul.u32 2, %s23
        %s253 = smul.u32 2, %s23
        %p254 = scmp.lt.s32.totalorder %s253, 1
        %s255 = scalar_select %p254, %s253, 1
        %s256 = scalar_lea.vmem %s2, %s255
        %s257 = smul.u32 2, %s23
        %s258 = smul.u32 10, %s22
        %s259 = smul.u32 2, %s23
        %p260 = scmp.eq.s32.totalorder %s24, 0
        // Predicated region
        $region33: #{tpu_custom_call.1} parent=31 // pred_check
          %p261 = pneg %p260
        $region34: #{tpu_custom_call.1} parent=31 // pred_check_branch
          %263 = sbr.rel (%p261) target = $region36
        $region35: #{tpu_custom_call.1} parent=31 // pred_region
          %v264 = vld [vmem:[%s256] sm:$0x3]
          %v266 = vlaneseq
          %v267 = vshrl.u32 %v266, 7
          %v268 = vsub.s32 0, %v267
          %v269 = vrot.slane %v264, %v268
          %v270 = vlaneseq
          %v271 = vshrl.u32 %v270, 7
          %v272 = vsub.s32 1, %v271
          %v273 = vrot.slane %v264, %v272
          %276 = vst [vmem:[#allocation2] sm:$0xff] %v269
          %vm277 = vcmask 523264
          %278 = vst.msk [vmem:[#allocation2 + $0x8] sm:$0xff] %vm277, %v273
          %279 = vst [vmem:[#allocation2 + $0x10] sm:$0xff] %v269
          %280 = vst.msk [vmem:[#allocation2 + $0x18] sm:$0xff] %vm277, %v273
          %281 = vst [vmem:[#allocation2 + $0x20] sm:$0xff] %v269
          %282 = vst.msk [vmem:[#allocation2 + $0x28] sm:$0xff] %vm277, %v273
          %283 = vst [vmem:[#allocation2 + $0x30] sm:$0xff] %v269
          %284 = vst.msk [vmem:[#allocation2 + $0x38] sm:$0xff] %vm277, %v273
          %285 = vst [vmem:[#allocation2 + $0x40] sm:$0xff] %v269
          %286 = vst.msk [vmem:[#allocation2 + $0x48] sm:$0xff] %vm277, %v273
          %287 = vst [vmem:[#allocation2 + $0x50] sm:$0xff] %v269
          %288 = vst.msk [vmem:[#allocation2 + $0x58] sm:$0xff] %vm277, %v273
          %289 = vst [vmem:[#allocation2 + $0x60] sm:$0xff] %v269
          %290 = vst.msk [vmem:[#allocation2 + $0x68] sm:$0xff] %vm277, %v273
          %291 = vst [vmem:[#allocation2 + $0x70] sm:$0xff] %v269
          %292 = vst.msk [vmem:[#allocation2 + $0x78] sm:$0xff] %vm277, %v273
          %293 = vst [vmem:[#allocation2 + $0x80] sm:$0xff] %v269
          %294 = vst.msk [vmem:[#allocation2 + $0x88] sm:$0xff] %vm277, %v273
          %295 = vst [vmem:[#allocation2 + $0x90] sm:$0xff] %v269
          %296 = vst.msk [vmem:[#allocation2 + $0x98] sm:$0xff] %vm277, %v273
        $region36: #{tpu_custom_call.1} parent=31 // pred_fallthru
          _
        %v297 = vld [vmem:[%s241] sm:$0xff]
        %v298 = vld [vmem:[%s241 + $0x8] sm:$0xff]
        %v299 = vld [vmem:[%s241 + $0x10] sm:$0xff]
        %v300 = vld [vmem:[%s241 + $0x18] sm:$0xff]
        %v301 = vld [vmem:[%s241 + $0x20] sm:$0xff]
        %v302 = vld [vmem:[%s241 + $0x28] sm:$0xff]
        %v303 = vld [vmem:[%s241 + $0x30] sm:$0xff]
        %v304 = vld [vmem:[%s241 + $0x38] sm:$0xff]
        %v305 = vld [vmem:[%s241 + $0x40] sm:$0xff]
        %v306 = vld [vmem:[%s241 + $0x48] sm:$0xff]
        %v307 = vld [vmem:[%s251] sm:$0xff]
        %v308 = vld [vmem:[#allocation2] sm:$0xff]
        %v309 = vld [vmem:[#allocation2 + $0x8] sm:$0xff]
        %v310 = vld [vmem:[#allocation2 + $0x10] sm:$0xff]
        %v311 = vld [vmem:[#allocation2 + $0x18] sm:$0xff]
        %v312 = vld [vmem:[#allocation2 + $0x20] sm:$0xff]
        %v313 = vld [vmem:[#allocation2 + $0x28] sm:$0xff]
        %v314 = vld [vmem:[#allocation2 + $0x30] sm:$0xff]
        %v315 = vld [vmem:[#allocation2 + $0x38] sm:$0xff]
        %v316 = vld [vmem:[#allocation2 + $0x40] sm:$0xff]
        %v317 = vld [vmem:[#allocation2 + $0x48] sm:$0xff]
        %v318 = vld [vmem:[#allocation2 + $0x50] sm:$0xff]
        %v319 = vld [vmem:[#allocation2 + $0x58] sm:$0xff]
        %v320 = vld [vmem:[#allocation2 + $0x60] sm:$0xff]
        %v321 = vld [vmem:[#allocation2 + $0x68] sm:$0xff]
        %v322 = vld [vmem:[#allocation2 + $0x70] sm:$0xff]
        %v323 = vld [vmem:[#allocation2 + $0x78] sm:$0xff]
        %v324 = vld [vmem:[#allocation2 + $0x80] sm:$0xff]
        %v325 = vld [vmem:[#allocation2 + $0x88] sm:$0xff]
        %v326 = vld [vmem:[#allocation2 + $0x90] sm:$0xff]
        %v327 = vld [vmem:[#allocation2 + $0x98] sm:$0xff]
        %329 = vset.pattern.permute.xlu0 0
        %330 = vperm.xlu0 %329, %v297
        %v331 = vpop.permute.xlu0 %330
        %334 = vset.pattern.permute.xlu0 0
        %335 = vperm.xlu0 %334, %v298
        %v336 = vpop.permute.xlu0 %335
        %339 = vset.pattern.permute.xlu0 0
        %340 = vperm.xlu0 %339, %v299
        %v341 = vpop.permute.xlu0 %340
        %344 = vset.pattern.permute.xlu0 0
        %345 = vperm.xlu0 %344, %v300
        %v346 = vpop.permute.xlu0 %345
        %349 = vset.pattern.permute.xlu0 0
        %350 = vperm.xlu0 %349, %v301
        %v351 = vpop.permute.xlu0 %350
        %354 = vset.pattern.permute.xlu0 0
        %355 = vperm.xlu0 %354, %v302
        %v356 = vpop.permute.xlu0 %355
        %359 = vset.pattern.permute.xlu0 0
        %360 = vperm.xlu0 %359, %v303
        %v361 = vpop.permute.xlu0 %360
        %364 = vset.pattern.permute.xlu0 0
        %365 = vperm.xlu0 %364, %v304
        %v366 = vpop.permute.xlu0 %365
        %369 = vset.pattern.permute.xlu0 0
        %370 = vperm.xlu0 %369, %v305
        %v371 = vpop.permute.xlu0 %370
        %374 = vset.pattern.permute.xlu0 0
        %375 = vperm.xlu0 %374, %v306
        %v376 = vpop.permute.xlu0 %375
        %v379 = vlaneseq
        %v380 = vshrl.u32 %v379, 7
        %v381 = vsub.s32 0, %v380
        %v382 = vrot.slane %v307, %v381
        %v383 = vlaneseq
        %v384 = vshrl.u32 %v383, 7
        %v385 = vsub.s32 4, %v384
        %v386 = vrot.slane %v307, %v385
        %v389 = vlaneseq
        %v390 = vshrl.u32 %v389, 7
        %v391 = vsub.s32 0, %v390
        %v392 = vrot.slane %v382, %v391
        %v393 = vlaneseq
        %v394 = vshrl.u32 %v393, 7
        %v395 = vsub.s32 0, %v394
        %v396 = vrot.slane %v386, %v395
        %v397 = vmul.f32 %v331, %v392
        %v398 = vmul.f32 %v331, %v396
        %v399 = vmul.f32 %v336, %v392
        %v400 = vmul.f32 %v336, %v396
        %v401 = vmul.f32 %v341, %v392
        %v402 = vmul.f32 %v341, %v396
        %v403 = vmul.f32 %v346, %v392
        %v404 = vmul.f32 %v346, %v396
        %v405 = vmul.f32 %v351, %v392
        %v406 = vmul.f32 %v351, %v396
        %v407 = vmul.f32 %v356, %v392
        %v408 = vmul.f32 %v356, %v396
        %v409 = vmul.f32 %v361, %v392
        %v410 = vmul.f32 %v361, %v396
        %v411 = vmul.f32 %v366, %v392
        %v412 = vmul.f32 %v366, %v396
        %v413 = vmul.f32 %v371, %v392
        %v414 = vmul.f32 %v371, %v396
        %v415 = vmul.f32 %v376, %v392
        %v416 = vmul.f32 %v376, %v396
        %v417 = vadd.f32 %v308, %v397
        %v418 = vadd.f32 %v309, %v398
        %v419 = vadd.f32 %v310, %v399
        %v420 = vadd.f32 %v311, %v400
        %v421 = vadd.f32 %v312, %v401
        %v422 = vadd.f32 %v313, %v402
        %v423 = vadd.f32 %v314, %v403
        %v424 = vadd.f32 %v315, %v404
        %v425 = vadd.f32 %v316, %v405
        %v426 = vadd.f32 %v317, %v406
        %v427 = vadd.f32 %v318, %v407
        %v428 = vadd.f32 %v319, %v408
        %v429 = vadd.f32 %v320, %v409
        %v430 = vadd.f32 %v321, %v410
        %v431 = vadd.f32 %v322, %v411
        %v432 = vadd.f32 %v323, %v412
        %v433 = vadd.f32 %v324, %v413
        %v434 = vadd.f32 %v325, %v414
        %v435 = vadd.f32 %v326, %v415
        %v436 = vadd.f32 %v327, %v416
        %437 = vset.pattern.permute.xlu0 1
        %438 = vperm.xlu0 %437, %v297
        %v439 = vpop.permute.xlu0 %438
        %441 = vset.pattern.permute.xlu0 1
        %442 = vperm.xlu0 %441, %v298
        %v443 = vpop.permute.xlu0 %442
        %445 = vset.pattern.permute.xlu0 1
        %446 = vperm.xlu0 %445, %v299
        %v447 = vpop.permute.xlu0 %446
        %449 = vset.pattern.permute.xlu0 1
        %450 = vperm.xlu0 %449, %v300
        %v451 = vpop.permute.xlu0 %450
        %453 = vset.pattern.permute.xlu0 1
        %454 = vperm.xlu0 %453, %v301
        %v455 = vpop.permute.xlu0 %454
        %457 = vset.pattern.permute.xlu0 1
        %458 = vperm.xlu0 %457, %v302
        %v459 = vpop.permute.xlu0 %458
        %461 = vset.pattern.permute.xlu0 1
        %462 = vperm.xlu0 %461, %v303
        %v463 = vpop.permute.xlu0 %462
        %465 = vset.pattern.permute.xlu0 1
        %466 = vperm.xlu0 %465, %v304
        %v467 = vpop.permute.xlu0 %466
        %469 = vset.pattern.permute.xlu0 1
        %470 = vperm.xlu0 %469, %v305
        %v471 = vpop.permute.xlu0 %470
        %473 = vset.pattern.permute.xlu0 1
        %474 = vperm.xlu0 %473, %v306
        %v475 = vpop.permute.xlu0 %474
        %v477 = vlaneseq
        %v478 = vshrl.u32 %v477, 7
        %v479 = vsub.s32 1, %v478
        %v480 = vrot.slane %v307, %v479
        %v481 = vlaneseq
        %v482 = vshrl.u32 %v481, 7
        %v483 = vsub.s32 5, %v482
        %v484 = vrot.slane %v307, %v483
        %v487 = vlaneseq
        %v488 = vshrl.u32 %v487, 7
        %v489 = vsub.s32 1, %v488
        %v490 = vrot.slane %v480, %v489
        %v491 = vlaneseq
        %v492 = vshrl.u32 %v491, 7
        %v493 = vsub.s32 1, %v492
        %v494 = vrot.slane %v484, %v493
        %v495 = vmul.f32 %v439, %v490
        %v496 = vmul.f32 %v439, %v494
        %v497 = vmul.f32 %v443, %v490
        %v498 = vmul.f32 %v443, %v494
        %v499 = vmul.f32 %v447, %v490
        %v500 = vmul.f32 %v447, %v494
        %v501 = vmul.f32 %v451, %v490
        %v502 = vmul.f32 %v451, %v494
        %v503 = vmul.f32 %v455, %v490
        %v504 = vmul.f32 %v455, %v494
        %v505 = vmul.f32 %v459, %v490
        %v506 = vmul.f32 %v459, %v494
        %v507 = vmul.f32 %v463, %v490
        %v508 = vmul.f32 %v463, %v494
        %v509 = vmul.f32 %v467, %v490
        %v510 = vmul.f32 %v467, %v494
        %v511 = vmul.f32 %v471, %v490
        %v512 = vmul.f32 %v471, %v494
        %v513 = vmul.f32 %v475, %v490
        %v514 = vmul.f32 %v475, %v494
        %v515 = vadd.f32 %v417, %v495
        %v516 = vadd.f32 %v418, %v496
        %v517 = vadd.f32 %v419, %v497
        %v518 = vadd.f32 %v420, %v498
        %v519 = vadd.f32 %v421, %v499
        %v520 = vadd.f32 %v422, %v500
        %v521 = vadd.f32 %v423, %v501
        %v522 = vadd.f32 %v424, %v502
        %v523 = vadd.f32 %v425, %v503
        %v524 = vadd.f32 %v426, %v504
        %v525 = vadd.f32 %v427, %v505
        %v526 = vadd.f32 %v428, %v506
        %v527 = vadd.f32 %v429, %v507
        %v528 = vadd.f32 %v430, %v508
        %v529 = vadd.f32 %v431, %v509
        %v530 = vadd.f32 %v432, %v510
        %v531 = vadd.f32 %v433, %v511
        %v532 = vadd.f32 %v434, %v512
        %v533 = vadd.f32 %v435, %v513
        %v534 = vadd.f32 %v436, %v514
        %535 = vset.pattern.permute.xlu0 2
        %536 = vperm.xlu0 %535, %v297
        %v537 = vpop.permute.xlu0 %536
        %539 = vset.pattern.permute.xlu0 2
        %540 = vperm.xlu0 %539, %v298
        %v541 = vpop.permute.xlu0 %540
        %543 = vset.pattern.permute.xlu0 2
        %544 = vperm.xlu0 %543, %v299
        %v545 = vpop.permute.xlu0 %544
        %547 = vset.pattern.permute.xlu0 2
        %548 = vperm.xlu0 %547, %v300
        %v549 = vpop.permute.xlu0 %548
        %551 = vset.pattern.permute.xlu0 2
        %552 = vperm.xlu0 %551, %v301
        %v553 = vpop.permute.xlu0 %552
        %555 = vset.pattern.permute.xlu0 2
        %556 = vperm.xlu0 %555, %v302
        %v557 = vpop.permute.xlu0 %556
        %559 = vset.pattern.permute.xlu0 2
        %560 = vperm.xlu0 %559, %v303
        %v561 = vpop.permute.xlu0 %560
        %563 = vset.pattern.permute.xlu0 2
        %564 = vperm.xlu0 %563, %v304
        %v565 = vpop.permute.xlu0 %564
        %567 = vset.pattern.permute.xlu0 2
        %568 = vperm.xlu0 %567, %v305
        %v569 = vpop.permute.xlu0 %568
        %571 = vset.pattern.permute.xlu0 2
        %572 = vperm.xlu0 %571, %v306
        %v573 = vpop.permute.xlu0 %572
        %v575 = vlaneseq
        %v576 = vshrl.u32 %v575, 7
        %v577 = vsub.s32 2, %v576
        %v578 = vrot.slane %v307, %v577
        %v579 = vlaneseq
        %v580 = vshrl.u32 %v579, 7
        %v581 = vsub.s32 6, %v580
        %v582 = vrot.slane %v307, %v581
        %v585 = vlaneseq
        %v586 = vshrl.u32 %v585, 7
        %v587 = vsub.s32 2, %v586
        %v588 = vrot.slane %v578, %v587
        %v589 = vlaneseq
        %v590 = vshrl.u32 %v589, 7
        %v591 = vsub.s32 2, %v590
        %v592 = vrot.slane %v582, %v591
        %v593 = vmul.f32 %v537, %v588
        %v594 = vmul.f32 %v537, %v592
        %v595 = vmul.f32 %v541, %v588
        %v596 = vmul.f32 %v541, %v592
        %v597 = vmul.f32 %v545, %v588
        %v598 = vmul.f32 %v545, %v592
        %v599 = vmul.f32 %v549, %v588
        %v600 = vmul.f32 %v549, %v592
        %v601 = vmul.f32 %v553, %v588
        %v602 = vmul.f32 %v553, %v592
        %v603 = vmul.f32 %v557, %v588
        %v604 = vmul.f32 %v557, %v592
        %v605 = vmul.f32 %v561, %v588
        %v606 = vmul.f32 %v561, %v592
        %v607 = vmul.f32 %v565, %v588
        %v608 = vmul.f32 %v565, %v592
        %v609 = vmul.f32 %v569, %v588
        %v610 = vmul.f32 %v569, %v592
        %v611 = vmul.f32 %v573, %v588
        %v612 = vmul.f32 %v573, %v592
        %v613 = vadd.f32 %v515, %v593
        %v614 = vadd.f32 %v516, %v594
        %v615 = vadd.f32 %v517, %v595
        %v616 = vadd.f32 %v518, %v596
        %v617 = vadd.f32 %v519, %v597
        %v618 = vadd.f32 %v520, %v598
        %v619 = vadd.f32 %v521, %v599
        %v620 = vadd.f32 %v522, %v600
        %v621 = vadd.f32 %v523, %v601
        %v622 = vadd.f32 %v524, %v602
        %v623 = vadd.f32 %v525, %v603
        %v624 = vadd.f32 %v526, %v604
        %v625 = vadd.f32 %v527, %v605
        %v626 = vadd.f32 %v528, %v606
        %v627 = vadd.f32 %v529, %v607
        %v628 = vadd.f32 %v530, %v608
        %v629 = vadd.f32 %v531, %v609
        %v630 = vadd.f32 %v532, %v610
        %v631 = vadd.f32 %v533, %v611
        %v632 = vadd.f32 %v534, %v612
        %633 = vset.pattern.permute.xlu0 3
        %634 = vperm.xlu0 %633, %v297
        %v635 = vpop.permute.xlu0 %634
        %637 = vset.pattern.permute.xlu0 3
        %638 = vperm.xlu0 %637, %v298
        %v639 = vpop.permute.xlu0 %638
        %641 = vset.pattern.permute.xlu0 3
        %642 = vperm.xlu0 %641, %v299
        %v643 = vpop.permute.xlu0 %642
        %645 = vset.pattern.permute.xlu0 3
        %646 = vperm.xlu0 %645, %v300
        %v647 = vpop.permute.xlu0 %646
        %649 = vset.pattern.permute.xlu0 3
        %650 = vperm.xlu0 %649, %v301
        %v651 = vpop.permute.xlu0 %650
        %653 = vset.pattern.permute.xlu0 3
        %654 = vperm.xlu0 %653, %v302
        %v655 = vpop.permute.xlu0 %654
        %657 = vset.pattern.permute.xlu0 3
        %658 = vperm.xlu0 %657, %v303
        %v659 = vpop.permute.xlu0 %658
        %661 = vset.pattern.permute.xlu0 3
        %662 = vperm.xlu0 %661, %v304
        %v663 = vpop.permute.xlu0 %662
        %665 = vset.pattern.permute.xlu0 3
        %666 = vperm.xlu0 %665, %v305
        %v667 = vpop.permute.xlu0 %666
        %669 = vset.pattern.permute.xlu0 3
        %670 = vperm.xlu0 %669, %v306
        %v671 = vpop.permute.xlu0 %670
        %v673 = vlaneseq
        %v674 = vshrl.u32 %v673, 7
        %v675 = vsub.s32 3, %v674
        %v676 = vrot.slane %v307, %v675
        %v677 = vlaneseq
        %v678 = vshrl.u32 %v677, 7
        %v679 = vsub.s32 7, %v678
        %v680 = vrot.slane %v307, %v679
        %v683 = vlaneseq
        %v684 = vshrl.u32 %v683, 7
        %v685 = vsub.s32 3, %v684
        %v686 = vrot.slane %v676, %v685
        %v687 = vlaneseq
        %v688 = vshrl.u32 %v687, 7
        %v689 = vsub.s32 3, %v688
        %v690 = vrot.slane %v680, %v689
        %v691 = vmul.f32 %v635, %v686
        %v692 = vmul.f32 %v635, %v690
        %v693 = vmul.f32 %v639, %v686
        %v694 = vmul.f32 %v639, %v690
        %v695 = vmul.f32 %v643, %v686
        %v696 = vmul.f32 %v643, %v690
        %v697 = vmul.f32 %v647, %v686
        %v698 = vmul.f32 %v647, %v690
        %v699 = vmul.f32 %v651, %v686
        %v700 = vmul.f32 %v651, %v690
        %v701 = vmul.f32 %v655, %v686
        %v702 = vmul.f32 %v655, %v690
        %v703 = vmul.f32 %v659, %v686
        %v704 = vmul.f32 %v659, %v690
        %v705 = vmul.f32 %v663, %v686
        %v706 = vmul.f32 %v663, %v690
        %v707 = vmul.f32 %v667, %v686
        %v708 = vmul.f32 %v667, %v690
        %v709 = vmul.f32 %v671, %v686
        %v710 = vmul.f32 %v671, %v690
        %v711 = vadd.f32 %v613, %v691
        %v712 = vadd.f32 %v614, %v692
        %v713 = vadd.f32 %v615, %v693
        %v714 = vadd.f32 %v616, %v694
        %v715 = vadd.f32 %v617, %v695
        %v716 = vadd.f32 %v618, %v696
        %v717 = vadd.f32 %v619, %v697
        %v718 = vadd.f32 %v620, %v698
        %v719 = vadd.f32 %v621, %v699
        %v720 = vadd.f32 %v622, %v700
        %v721 = vadd.f32 %v623, %v701
        %v722 = vadd.f32 %v624, %v702
        %v723 = vadd.f32 %v625, %v703
        %v724 = vadd.f32 %v626, %v704
        %v725 = vadd.f32 %v627, %v705
        %v726 = vadd.f32 %v628, %v706
        %v727 = vadd.f32 %v629, %v707
        %v728 = vadd.f32 %v630, %v708
        %v729 = vadd.f32 %v631, %v709
        %v730 = vadd.f32 %v632, %v710
        %731 = vst [vmem:[#allocation2] sm:$0xff] %v711
        %vm732 = vcmask 523264
        %733 = vst.msk [vmem:[#allocation2 + $0x8] sm:$0xff] %vm732, %v712
        %734 = vst [vmem:[#allocation2 + $0x10] sm:$0xff] %v713
        %735 = vst.msk [vmem:[#allocation2 + $0x18] sm:$0xff] %vm732, %v714
        %736 = vst [vmem:[#allocation2 + $0x20] sm:$0xff] %v715
        %737 = vst.msk [vmem:[#allocation2 + $0x28] sm:$0xff] %vm732, %v716
        %738 = vst [vmem:[#allocation2 + $0x30] sm:$0xff] %v717
        %739 = vst.msk [vmem:[#allocation2 + $0x38] sm:$0xff] %vm732, %v718
        %740 = vst [vmem:[#allocation2 + $0x40] sm:$0xff] %v719
        %741 = vst.msk [vmem:[#allocation2 + $0x48] sm:$0xff] %vm732, %v720
        %742 = vst [vmem:[#allocation2 + $0x50] sm:$0xff] %v721
        %743 = vst.msk [vmem:[#allocation2 + $0x58] sm:$0xff] %vm732, %v722
        %744 = vst [vmem:[#allocation2 + $0x60] sm:$0xff] %v723
        %745 = vst.msk [vmem:[#allocation2 + $0x68] sm:$0xff] %vm732, %v724
        %746 = vst [vmem:[#allocation2 + $0x70] sm:$0xff] %v725
        %747 = vst.msk [vmem:[#allocation2 + $0x78] sm:$0xff] %vm732, %v726
        %748 = vst [vmem:[#allocation2 + $0x80] sm:$0xff] %v727
        %749 = vst.msk [vmem:[#allocation2 + $0x88] sm:$0xff] %vm732, %v728
        %750 = vst [vmem:[#allocation2 + $0x90] sm:$0xff] %v729
        %751 = vst.msk [vmem:[#allocation2 + $0x98] sm:$0xff] %vm732, %v730
        // Predicated region
        $region37: #{tpu_custom_call.1} parent=31 // pred_check
          %p752 = pneg %p260
        $region38: #{tpu_custom_call.1} parent=31 // pred_check_branch
          %754 = sbr.rel (%p752) target = $region40
        $region39: #{tpu_custom_call.1} parent=31 // pred_region
          %v755 = vld [vmem:[#allocation2] sm:$0xff]
          %v756 = vld [vmem:[#allocation2 + $0x8] sm:$0xff]
          %v757 = vld [vmem:[#allocation2 + $0x10] sm:$0xff]
          %v758 = vld [vmem:[#allocation2 + $0x18] sm:$0xff]
          %v759 = vld [vmem:[#allocation2 + $0x20] sm:$0xff]
          %v760 = vld [vmem:[#allocation2 + $0x28] sm:$0xff]
          %v761 = vld [vmem:[#allocation2 + $0x30] sm:$0xff]
          %v762 = vld [vmem:[#allocation2 + $0x38] sm:$0xff]
          %v763 = vld [vmem:[#allocation2 + $0x40] sm:$0xff]
          %v764 = vld [vmem:[#allocation2 + $0x48] sm:$0xff]
          %v765 = vld [vmem:[#allocation2 + $0x50] sm:$0xff]
          %v766 = vld [vmem:[#allocation2 + $0x58] sm:$0xff]
          %v767 = vld [vmem:[#allocation2 + $0x60] sm:$0xff]
          %v768 = vld [vmem:[#allocation2 + $0x68] sm:$0xff]
          %v769 = vld [vmem:[#allocation2 + $0x70] sm:$0xff]
          %v770 = vld [vmem:[#allocation2 + $0x78] sm:$0xff]
          %v771 = vld [vmem:[#allocation2 + $0x80] sm:$0xff]
          %v772 = vld [vmem:[#allocation2 + $0x88] sm:$0xff]
          %v773 = vld [vmem:[#allocation2 + $0x90] sm:$0xff]
          %v774 = vld [vmem:[#allocation2 + $0x98] sm:$0xff]
          %775 = vst [vmem:[%s233] sm:$0xff] %v755
          %776 = vst.msk [vmem:[%s233 + $0x8] sm:$0xff] %vm732, %v756
          %777 = vst [vmem:[%s233 + $0x10] sm:$0xff] %v757
          %778 = vst.msk [vmem:[%s233 + $0x18] sm:$0xff] %vm732, %v758
          %779 = vst [vmem:[%s233 + $0x20] sm:$0xff] %v759
          %780 = vst.msk [vmem:[%s233 + $0x28] sm:$0xff] %vm732, %v760
          %781 = vst [vmem:[%s233 + $0x30] sm:$0xff] %v761
          %782 = vst.msk [vmem:[%s233 + $0x38] sm:$0xff] %vm732, %v762
          %783 = vst [vmem:[%s233 + $0x40] sm:$0xff] %v763
          %784 = vst.msk [vmem:[%s233 + $0x48] sm:$0xff] %vm732, %v764
          %785 = vst [vmem:[%s233 + $0x50] sm:$0xff] %v765
          %786 = vst.msk [vmem:[%s233 + $0x58] sm:$0xff] %vm732, %v766
          %787 = vst [vmem:[%s233 + $0x60] sm:$0xff] %v767
          %788 = vst.msk [vmem:[%s233 + $0x68] sm:$0xff] %vm732, %v768
          %789 = vst [vmem:[%s233 + $0x70] sm:$0xff] %v769
          %790 = vst.msk [vmem:[%s233 + $0x78] sm:$0xff] %vm732, %v770
          %791 = vst [vmem:[%s233 + $0x80] sm:$0xff] %v771
          %792 = vst.msk [vmem:[%s233 + $0x88] sm:$0xff] %vm732, %v772
          %793 = vst [vmem:[%s233 + $0x90] sm:$0xff] %v773
          %794 = vst.msk [vmem:[%s233 + $0x98] sm:$0xff] %vm732, %v774
        $region40: #{tpu_custom_call.1} parent=31 // pred_fallthru
          _
        %s795 = sand.u32 %s128, 1
        %s796 = scalar_lea.sflag [#allocation4], %s795
        %s797 = sand.u32 %s128, 1
        %s798 = smul.addr %s797, 160
        %s799 = scalar_lea.vmem [#allocation3], %s798
        // Predicated region
        $region41: #{tpu_custom_call.1} parent=31 // pred_check
          %p800 = pneg %p138
        $region42: #{tpu_custom_call.1} parent=31 // pred_check_branch
          %802 = sbr.rel (%p800) target = $region44
        $region43: #{tpu_custom_call.1} parent=31 // pred_region
          %s803 = smul.u32 10, %s22
          %s804 = smul.u32 2, %s23
          %s806 = ssub.s32 2560, 2560
          %807 = vsyncadd %s796, %s806
          %s808 = smul.addr %s803, 2
          %s809 = sadd.s32 %s804, %s808
          %s810 = smul.addr %s809, 128
          %s811 = scalar_lea.hbm %s3, %s810
          %s812 = sshll.u32 %s799, 4
          %s813 = int_to_ptr.vmem [resolvable:$true] %s812
          %818 = dma.vmem_to_hbm [thread:$0]  %s813, 2560, %s811, %s796, 256, 256, 16
        $region44: #{tpu_custom_call.1} parent=31 // pred_fallthru
          _
      $region32: #{tpu_custom_call.1} parent=5 // pred_fallthru
        _
      %p819 = scmp.le.s32.totalorder 2, %s12
      // Predicated region
      $region45: #{tpu_custom_call.1} parent=5 // pred_check
        %p820 = pneg %p819
      $region46: #{tpu_custom_call.1} parent=5 // pred_check_branch
        %822 = sbr.rel (%p820) target = $region48
      $region47: #{tpu_custom_call.1} parent=5 // pred_region
        %s823 = ssub.s32 %s12, 2
        // Predicated region
        $region49: #{tpu_custom_call.1} parent=47 // pred_check
          %p824 = pneg %p144
        $region50: #{tpu_custom_call.1} parent=47 // pred_check_branch
          %826 = sbr.rel (%p824) target = $region52
        $region51: #{tpu_custom_call.1} parent=47 // pred_region
          %s827 = sand.u32 %s129, 1
          %s828 = scalar_lea.sflag [#allocation4], %s827
          %s829 = sand.u32 %s129, 1
          %s830 = smul.addr %s829, 160
          %s831 = scalar_lea.vmem [#allocation3], %s830
          %832 = dma.done %s828, 2560
        $region52: #{tpu_custom_call.1} parent=47 // pred_fallthru
          _
      $region48: #{tpu_custom_call.1} parent=5 // pred_fallthru
        _
    $region6: #{tpu_custom_call.1} parent=1 // loop_footer
      %s16 = sadd.s32 1, %s12
    $region7: #{tpu_custom_call.1} parent=1 // loop_footer_branch
      %11 = sbr.rel target = $region3
    $region8: #{tpu_custom_call.1} parent=1 // loop_exit
      _
    %833 = vsyncpa [#allocation4], 1
    %s834 = scalar_lea.sflag [#allocation4], 1
    %835 = vsyncpa %s834, 1

</llo_original>
